<compile_context>
chip_gen: v5e
topology: v5e:2x2
jax: 0.10.0
libtpu: 0.0.40
codegen_flags: <defaults>
</compile_context>

<pallas_src>
import functools

import numpy as np

import jax
import jax.numpy as jnp
from jax.experimental import pallas as pl
from jax.experimental.pallas import tpu as pltpu


def _round_up(x, m):
    return ((x + m - 1) // m) * m


def _pick_nb(N, H_out_pad):
    """Images per grid step: target M = NB*H_out_pad ~ 128 rows, but keep at
    least a couple of grid steps when the batch allows it (v7x: both TCs busy,
    input DMA double-buffered)."""
    nb = max(1, 128 // H_out_pad)
    if N >= 4:
        nb = min(nb, max(1, N // 4))
    elif N >= 2:
        nb = min(nb, max(1, N // 2))
    return max(1, min(nb, N))


def _build_banded_weight(weight_oihw, pad_l, W, W_out, dtype):
    """wb[kh*W*C_in + wi*C_in + c, wo*C_out + co] = w[co, c, kh, kw]
    whenever wi == wo + kw - pad_l lies in [0, W); out-of-range taps (the
    left/right zero padding) never appear and thus contribute 0.
    Built with one einsum against a static 0/1 band (no traced scatter loop)."""
    C_out, C_in, KH, KW = weight_oihw.shape
    band = np.zeros((KW, W, W_out), np.float32)
    for kw in range(KW):
        wo = np.arange(W_out)
        wi = wo + kw - pad_l
        ok = (wi >= 0) & (wi < W)
        band[kw, wi[ok], wo[ok]] = 1.0
    w_t = jnp.transpose(weight_oihw, (2, 3, 1, 0)).astype(jnp.float32)  # (KH,KW,Ci,Co)
    wb = jnp.einsum("xio,kxcn->kicon", jnp.asarray(band), w_t)          # (KH,W,Ci,Wo,Co)
    return wb.reshape(KH * W * C_in, W_out * C_out).astype(dtype)


def _pad_conv_kernel(x_ref, w_ref, b_ref, o_ref, col_ref, acc_ref, *,
                     pad_t, H, KH, WC, H_out, H_out_pad, NB, K_pad):
    """Grid = (cdiv(N, NB),). One block of NB images per step.

    x_ref   : (NB, H, WC)            raw input rows, channels-fast, compute dtype
    w_ref   : (K_pad, N_pad)         im2col-folded banded weight
    b_ref   : (1, N_pad)             lane-dense bias, f32
    o_ref   : (NB, H_out_pad, N_pad) lane-dense output slabs
    col_ref : VMEM (NB*H_out_pad, K_pad) im2col scratch
    acc_ref : VMEM (NB*H_out_pad, N_pad) f32 accumulator
    """
    KWC = KH * WC
    dt = col_ref.dtype

    # K padding columns multiply zero weight rows, but uninitialized VMEM could
    # hold NaNs -> zero them.  (Done every step: no cross-iteration dependency,
    # so the batch grid axis stays 'parallel'.)
    if K_pad > KWC:
        col_ref[:, KWC:] = jnp.zeros((NB * H_out_pad, K_pad - KWC), dt)

    # Build the im2col LHS straight from x_ref.  Vertical zero padding shows up
    # as statically-zeroed row ranges per tap; horizontal padding lives in the
    # banded weight.  No padded-image copy.
    for b in range(NB):
        r0 = b * H_out_pad
        if H_out_pad > H_out:  # alignment-only rows, discarded by the wrapper
            col_ref[r0 + H_out:r0 + H_out_pad, :KWC] = jnp.zeros(
                (H_out_pad - H_out, KWC), dt)
        for kh in range(KH):
            c0 = kh * WC
            lo = max(0, pad_t - kh)            # first valid output row for this tap
            hi = min(H_out, H + pad_t - kh)    # one past the last valid output row
            if lo > 0:
                col_ref[r0:r0 + lo, c0:c0 + WC] = jnp.zeros((lo, WC), dt)
            if hi < H_out:
                col_ref[r0 + hi:r0 + H_out, c0:c0 + WC] = jnp.zeros(
                    (H_out - hi, WC), dt)
            if hi > lo:
                col_ref[r0 + lo:r0 + hi, c0:c0 + WC] = (
                    x_ref[b, lo + kh - pad_t:hi + kh - pad_t, :])

    # ONE MXU matmul per grid step: (NB*H_out_pad, K_pad) @ (K_pad, N_pad),
    # f32 accumulation into VMEM (bounds register pressure when M is large).
    acc_ref[...] = jnp.dot(col_ref[...], w_ref[...],
                           preferred_element_type=jnp.float32)

    # Bias add + cast + lane-dense store, one sublane-aligned slab per image.
    for b in range(NB):
        r0 = b * H_out_pad
        o_ref[b] = (acc_ref[r0:r0 + H_out_pad, :] + b_ref[...]).astype(o_ref.dtype)


def asymmetric_padding_conv(x_nchw, weight_oihw, bias, paddings_lrtb,
                            compute_dtype=jnp.bfloat16):
    """Equivalent of AsymmetricPaddingWrapper(Conv2d(..., padding=0), lrtb)."""
    pad_l, pad_r, pad_t, pad_b = paddings_lrtb
    N, C_in, H, W = x_nchw.shape
    C_out, C_in_w, KH, KW = weight_oihw.shape
    assert C_in == C_in_w
    Hp, Wp = H + pad_t + pad_b, W + pad_l + pad_r
    H_out, W_out = Hp - KH + 1, Wp - KW + 1
    out_dtype = x_nchw.dtype

    WC = W * C_in
    K = KH * WC
    N_out = W_out * C_out
    K_pad = _round_up(K, 128)        # 192 -> 256: clean MXU K passes
    N_pad = _round_up(N_out, 128)    # 136 -> 256: unmasked lane-dense stores
    H_out_pad = _round_up(H_out, 8)  # sublane-aligned per-image row blocks

    NB = _pick_nb(N, H_out_pad)
    n_steps = -(-N // NB)
    N_padded = n_steps * NB
    M_blk = NB * H_out_pad

    # ---- glue: layout plumbing + one-time weight restructuring (no conv math) ----
    x = jnp.transpose(x_nchw, (0, 2, 3, 1)).reshape(N, H, WC).astype(compute_dtype)
    if N_padded > N:
        x = jnp.pad(x, ((0, N_padded - N), (0, 0), (0, 0)))

    wb = _build_banded_weight(weight_oihw, pad_l, W, W_out, compute_dtype)
    wb_p = jnp.zeros((K_pad, N_pad), compute_dtype).at[:K, :N_out].set(wb)
    b_dense = jnp.zeros((1, N_pad), jnp.float32).at[0, :N_out].set(
        jnp.tile(bias.astype(jnp.float32), W_out))

    kernel = functools.partial(
        _pad_conv_kernel, pad_t=pad_t, H=H, KH=KH, WC=WC,
        H_out=H_out, H_out_pad=H_out_pad, NB=NB, K_pad=K_pad)

    itm = jnp.dtype(compute_dtype).itemsize
    est = (2 * NB * H * WC * itm                     # input (double-buffered)
           + K_pad * N_pad * itm                     # weight (single-buffered)
           + 2 * N_pad * 4                           # bias
           + 2 * NB * H_out_pad * N_pad * jnp.dtype(out_dtype).itemsize
           + M_blk * K_pad * itm                     # im2col scratch
           + M_blk * N_pad * 4)                      # f32 accumulator
    vmem_limit = int(min(max(4 * est, 8 << 20), 64 << 20))

    def _call(weight_pipeline_mode):
        if weight_pipeline_mode is None:
            w_spec = pl.BlockSpec((K_pad, N_pad), lambda i: (0, 0))
        else:
            w_spec = pl.BlockSpec((K_pad, N_pad), lambda i: (0, 0),
                                  pipeline_mode=weight_pipeline_mode)
        return pl.pallas_call(
            kernel,
            out_shape=jax.ShapeDtypeStruct((N_padded, H_out_pad, N_pad), out_dtype),
            grid_spec=pltpu.PrefetchScalarGridSpec(
                num_scalar_prefetch=0,
                grid=(n_steps,),
                in_specs=[
                    pl.BlockSpec((NB, H, WC), lambda i: (i, 0, 0)),
                    w_spec,
                    pl.BlockSpec((1, N_pad), lambda i: (0, 0)),
                ],
                out_specs=pl.BlockSpec((NB, H_out_pad, N_pad),
                                       lambda i: (i, 0, 0)),
                scratch_shapes=[
                    pltpu.VMEM((M_blk, K_pad), compute_dtype),
                    pltpu.VMEM((M_blk, N_pad), jnp.float32),
                ],
            ),
            compiler_params=pltpu.CompilerParams(
                dimension_semantics=("parallel",),
                vmem_limit_bytes=vmem_limit),
        )(x, wb_p, b_dense)

    try:
        # Weight index_map is constant across the grid -> a second pipeline
        # buffer would only waste VMEM (matters at real sizes on v7x).
        out = _call(pl.Buffered(1))
    except Exception:  # portability fallback if pipeline_mode is unsupported
        out = _call(None)

    # glue: lane-dense slab -> NCHW (drop alignment padding)
    out = out[:N, :H_out, :N_out].reshape(N, H_out, W_out, C_out)
    return jnp.transpose(out, (0, 3, 1, 2))


if __name__ == "__main__":
    key = jax.random.PRNGKey(0)
    kx, kw_key, kb_key = jax.random.split(key, 3)

    # Small shapes consistent with the module's forward (NCHW conv input).
    N, C_in, H, W = 2, 4, 16, 16
    C_out, KH, KW = 8, 3, 3
    paddings_lrtb = (1, 2, 0, 1)   # asymmetric (left, right, top, bottom)

    x = jax.random.normal(kx, (N, C_in, H, W), jnp.float32)
    # Deterministic, synthetic "core_module" = Conv2d(4, 8, 3, padding=0) params.
    weight = 0.1 * jax.random.normal(kw_key, (C_out, C_in, KH, KW), jnp.float32)
    bias = 0.1 * jax.random.normal(kb_key, (C_out,), jnp.float32)

    y = asymmetric_padding_conv(x, weight, bias, paddings_lrtb)
    y = jax.block_until_ready(y)

    # Reference: ZeroPad2d(l,r,t,b) then a VALID conv (matches PyTorch), on the
    # same bf16-quantized operands the kernel feeds to the MXU (f32 accumulate),
    # so only summation-order differences remain.
    pad_l, pad_r, pad_t, pad_b = paddings_lrtb
    xq = x.astype(jnp.bfloat16).astype(jnp.float32)
    wq = weight.astype(jnp.bfloat16).astype(jnp.float32)
    x_pad = jnp.pad(xq, ((0, 0), (0, 0), (pad_t, pad_b), (pad_l, pad_r)))
    y_ref = jax.lax.conv_general_dilated(
        x_pad, wq, window_strides=(1, 1), padding="VALID",
        dimension_numbers=("NCHW", "OIHW", "NCHW")) + bias[None, :, None, None]

    assert y.shape == y_ref.shape, (y.shape, y_ref.shape)
    assert jnp.allclose(y, y_ref, atol=1e-3, rtol=1e-3), \
        float(jnp.max(jnp.abs(y - y_ref)))
    print("KERNEL_OK")
</pallas_src>

<mosaic_0001>
module attributes {stable_mosaic.version = 11 : i64} {
  func.func @_pad_conv_kernel(%arg0: i32, %arg1: memref<1x16x64xbf16, #tpu.memory_space<vmem>>, %arg2: memref<256x256xbf16, #tpu.memory_space<vmem>>, %arg3: memref<1x256xf32, #tpu.memory_space<vmem>>, %arg4: memref<1x16x256xf32, #tpu.memory_space<vmem>>, %arg5: memref<16x256xbf16, #tpu.memory_space<vmem>>, %arg6: memref<16x256xf32, #tpu.memory_space<vmem>>) attributes {dimension_semantics = [#tpu.dimension_semantics<parallel>], iteration_bounds = array<i64: 2>, scalar_prefetch = 0 : i64, scratch_operands = 2 : i64, tpu.core_type = #tpu.core_type<tc>, window_params = [{transform_indices = @transform_0, window_bounds = array<i64: 1, 16, 64>}, {pipeline_mode = #tpu.pipeline_mode<synchronous>, transform_indices = @transform_1, window_bounds = array<i64: 256, 256>}, {pipeline_mode = #tpu.pipeline_mode<synchronous>, transform_indices = @transform_2, window_bounds = array<i64: 1, 256>}, {transform_indices = @transform_3, window_bounds = array<i64: 1, 16, 256>}]} {
    %cst = arith.constant 0.000000e+00 : bf16
    %0 = vector.broadcast %cst : bf16 to vector<16x64xbf16>
    %c0 = arith.constant 0 : index
    %c192 = arith.constant 192 : index
    %1 = vector.load %arg5[%c0, %c192] : memref<16x256xbf16, #tpu.memory_space<vmem>>, vector<16x64xbf16>
    tpu.vector_store %arg5[%c0, %c192], %0 {strides = array<i32>} : memref<16x256xbf16, #tpu.memory_space<vmem>>, vector<16x64xbf16>,
    %cst_0 = arith.constant 0.000000e+00 : bf16
    %2 = vector.broadcast %cst_0 : bf16 to vector<1x192xbf16>
    %c15 = arith.constant 15 : index
    %c0_1 = arith.constant 0 : index
    %3 = vector.load %arg5[%c15, %c0_1] : memref<16x256xbf16, #tpu.memory_space<vmem>>, vector<1x192xbf16>
    tpu.vector_store %arg5[%c15, %c0_1], %2 {strides = array<i32>} : memref<16x256xbf16, #tpu.memory_space<vmem>>, vector<1x192xbf16>,
    %c0_2 = arith.constant 0 : index
    %c0_3 = arith.constant 0 : index
    %c0_4 = arith.constant 0 : index
    %4 = vector.load %arg1[%c0_2, %c0_3, %c0_4] : memref<1x16x64xbf16, #tpu.memory_space<vmem>>, vector<1x15x64xbf16>
    %5 = vector.shape_cast %4 : vector<1x15x64xbf16> to vector<15x64xbf16>
    %c0_5 = arith.constant 0 : index
    %c0_6 = arith.constant 0 : index
    %6 = vector.load %arg5[%c0_5, %c0_6] : memref<16x256xbf16, #tpu.memory_space<vmem>>, vector<15x64xbf16>
    tpu.vector_store %arg5[%c0_5, %c0_6], %5 {strides = array<i32>} : memref<16x256xbf16, #tpu.memory_space<vmem>>, vector<15x64xbf16>,
    %c0_7 = arith.constant 0 : index
    %c1 = arith.constant 1 : index
    %c0_8 = arith.constant 0 : index
    %7 = vector.load %arg1[%c0_7, %c1, %c0_8] : memref<1x16x64xbf16, #tpu.memory_space<vmem>>, vector<1x15x64xbf16>
    %8 = vector.shape_cast %7 : vector<1x15x64xbf16> to vector<15x64xbf16>
    %c0_9 = arith.constant 0 : index
    %c64 = arith.constant 64 : index
    %9 = vector.load %arg5[%c0_9, %c64] : memref<16x256xbf16, #tpu.memory_space<vmem>>, vector<15x64xbf16>
    tpu.vector_store %arg5[%c0_9, %c64], %8 {strides = array<i32>} : memref<16x256xbf16, #tpu.memory_space<vmem>>, vector<15x64xbf16>,
    %cst_10 = arith.constant 0.000000e+00 : bf16
    %10 = vector.broadcast %cst_10 : bf16 to vector<1x64xbf16>
    %c14 = arith.constant 14 : index
    %c128 = arith.constant 128 : index
    %11 = vector.load %arg5[%c14, %c128] : memref<16x256xbf16, #tpu.memory_space<vmem>>, vector<1x64xbf16>
    tpu.vector_store %arg5[%c14, %c128], %10 {strides = array<i32>} : memref<16x256xbf16, #tpu.memory_space<vmem>>, vector<1x64xbf16>,
    %c0_11 = arith.constant 0 : index
    %c2 = arith.constant 2 : index
    %c0_12 = arith.constant 0 : index
    %12 = vector.load %arg1[%c0_11, %c2, %c0_12] : memref<1x16x64xbf16, #tpu.memory_space<vmem>>, vector<1x14x64xbf16>
    %13 = vector.shape_cast %12 : vector<1x14x64xbf16> to vector<14x64xbf16>
    %c0_13 = arith.constant 0 : index
    %c128_14 = arith.constant 128 : index
    %14 = vector.load %arg5[%c0_13, %c128_14] : memref<16x256xbf16, #tpu.memory_space<vmem>>, vector<14x64xbf16>
    tpu.vector_store %arg5[%c0_13, %c128_14], %13 {strides = array<i32>} : memref<16x256xbf16, #tpu.memory_space<vmem>>, vector<14x64xbf16>,
    %c0_15 = arith.constant 0 : index
    %c0_16 = arith.constant 0 : index
    %15 = vector.load %arg5[%c0_15, %c0_16] : memref<16x256xbf16, #tpu.memory_space<vmem>>, vector<16x256xbf16>
    %c0_17 = arith.constant 0 : index
    %c0_18 = arith.constant 0 : index
    %16 = vector.load %arg2[%c0_17, %c0_18] : memref<256x256xbf16, #tpu.memory_space<vmem>>, vector<256x256xbf16>
    %cst_19 = arith.constant dense<0.000000e+00> : vector<16x256xf32>
    %17 = tpu.matmul %15, %16, %cst_19 {dimension_numbers = #tpu.dot_dimension_numbers<[1], [0], [0], [1], [0, 0, 1, 1], [], []>} : vector<16x256xbf16>, vector<256x256xbf16>, vector<16x256xf32> -> vector<16x256xf32>
    %c0_20 = arith.constant 0 : index
    %c0_21 = arith.constant 0 : index
    %18 = vector.load %arg6[%c0_20, %c0_21] : memref<16x256xf32, #tpu.memory_space<vmem>>, vector<16x256xf32>
    tpu.vector_store %arg6[%c0_20, %c0_21], %17 {strides = array<i32>} : memref<16x256xf32, #tpu.memory_space<vmem>>, vector<16x256xf32>,
    %c0_22 = arith.constant 0 : index
    %c0_23 = arith.constant 0 : index
    %19 = vector.load %arg6[%c0_22, %c0_23] : memref<16x256xf32, #tpu.memory_space<vmem>>, vector<16x256xf32>
    %c0_24 = arith.constant 0 : index
    %c0_25 = arith.constant 0 : index
    %20 = vector.load %arg3[%c0_24, %c0_25] : memref<1x256xf32, #tpu.memory_space<vmem>>, vector<1x256xf32>
    %21 = vector.broadcast %20 : vector<1x256xf32> to vector<16x256xf32>
    %22 = arith.addf %19, %21 : vector<16x256xf32>
    %c0_26 = arith.constant 0 : index
    %c0_27 = arith.constant 0 : index
    %c0_28 = arith.constant 0 : index
    %23 = vector.load %arg4[%c0_26, %c0_27, %c0_28] : memref<1x16x256xf32, #tpu.memory_space<vmem>>, vector<1x16x256xf32>
    %24 = vector.shape_cast %23 : vector<1x16x256xf32> to vector<16x256xf32>
    %25 = vector.shape_cast %22 : vector<16x256xf32> to vector<1x16x256xf32>
    tpu.vector_store %arg4[%c0_26, %c0_27, %c0_28], %25 {strides = array<i32>} : memref<1x16x256xf32, #tpu.memory_space<vmem>>, vector<1x16x256xf32>,
    return
  }
  func.func @transform_0(%arg0: i32) -> (i32, i32, i32) {
    %c0_i32 = arith.constant 0 : i32
    %c0_i32_0 = arith.constant 0 : i32
    %c0_i32_1 = arith.constant 0 : i32
    return %arg0, %c0_i32, %c0_i32_0 : i32, i32, i32
  }
  func.func @transform_1(%arg0: i32) -> (i32, i32) {
    %c0_i32 = arith.constant 0 : i32
    %c0_i32_0 = arith.constant 0 : i32
    %c0_i32_1 = arith.constant 0 : i32
    return %c0_i32, %c0_i32_0 : i32, i32
  }
  func.func @transform_2(%arg0: i32) -> (i32, i32) {
    %c0_i32 = arith.constant 0 : i32
    %c0_i32_0 = arith.constant 0 : i32
    %c0_i32_1 = arith.constant 0 : i32
    return %c0_i32, %c0_i32_0 : i32, i32
  }
  func.func @transform_3(%arg0: i32) -> (i32, i32, i32) {
    %c0_i32 = arith.constant 0 : i32
    %c0_i32_0 = arith.constant 0 : i32
    %c0_i32_1 = arith.constant 0 : i32
    return %arg0, %c0_i32, %c0_i32_0 : i32, i32, i32
  }
}

module attributes {stable_mosaic.version = 11 : i64} {
  func.func @_pad_conv_kernel(%arg0: i32, %arg1: memref<1x16x64xbf16, #tpu.memory_space<vmem>>, %arg2: memref<256x256xbf16, #tpu.memory_space<vmem>>, %arg3: memref<1x256xf32, #tpu.memory_space<vmem>>, %arg4: memref<1x16x256xf32, #tpu.memory_space<vmem>>, %arg5: memref<16x256xbf16, #tpu.memory_space<vmem>>, %arg6: memref<16x256xf32, #tpu.memory_space<vmem>>) attributes {dimension_semantics = [#tpu.dimension_semantics<parallel>], iteration_bounds = array<i64: 2>, scalar_prefetch = 0 : i64, scratch_operands = 2 : i64, tpu.core_type = #tpu.core_type<tc>, window_params = [{transform_indices = @transform_0, window_bounds = array<i64: 1, 16, 64>}, {pipeline_mode = #tpu.pipeline_mode<synchronous>, transform_indices = @transform_1, window_bounds = array<i64: 256, 256>}, {pipeline_mode = #tpu.pipeline_mode<synchronous>, transform_indices = @transform_2, window_bounds = array<i64: 1, 256>}, {transform_indices = @transform_3, window_bounds = array<i64: 1, 16, 256>}]} {
    %cst = arith.constant 0.000000e+00 : bf16
    %0 = vector.broadcast %cst : bf16 to vector<16x64xbf16>
    %c0 = arith.constant 0 : index
    %c192 = arith.constant 192 : index
    %1 = vector.load %arg5[%c0, %c192] : memref<16x256xbf16, #tpu.memory_space<vmem>>, vector<16x64xbf16>
    tpu.vector_store %arg5[%c0, %c192], %0 {strides = array<i32>} : memref<16x256xbf16, #tpu.memory_space<vmem>>, vector<16x64xbf16>,
    %cst_0 = arith.constant 0.000000e+00 : bf16
    %2 = vector.broadcast %cst_0 : bf16 to vector<1x192xbf16>
    %c15 = arith.constant 15 : index
    %c0_1 = arith.constant 0 : index
    %3 = vector.load %arg5[%c15, %c0_1] : memref<16x256xbf16, #tpu.memory_space<vmem>>, vector<1x192xbf16>
    tpu.vector_store %arg5[%c15, %c0_1], %2 {strides = array<i32>} : memref<16x256xbf16, #tpu.memory_space<vmem>>, vector<1x192xbf16>,
    %c0_2 = arith.constant 0 : index
    %c0_3 = arith.constant 0 : index
    %c0_4 = arith.constant 0 : index
    %4 = vector.load %arg1[%c0_2, %c0_3, %c0_4] : memref<1x16x64xbf16, #tpu.memory_space<vmem>>, vector<1x15x64xbf16>
    %5 = vector.shape_cast %4 : vector<1x15x64xbf16> to vector<15x64xbf16>
    %c0_5 = arith.constant 0 : index
    %c0_6 = arith.constant 0 : index
    %6 = vector.load %arg5[%c0_5, %c0_6] : memref<16x256xbf16, #tpu.memory_space<vmem>>, vector<15x64xbf16>
    tpu.vector_store %arg5[%c0_5, %c0_6], %5 {strides = array<i32>} : memref<16x256xbf16, #tpu.memory_space<vmem>>, vector<15x64xbf16>,
    %c0_7 = arith.constant 0 : index
    %c1 = arith.constant 1 : index
    %c0_8 = arith.constant 0 : index
    %7 = vector.load %arg1[%c0_7, %c1, %c0_8] : memref<1x16x64xbf16, #tpu.memory_space<vmem>>, vector<1x15x64xbf16>
    %8 = vector.shape_cast %7 : vector<1x15x64xbf16> to vector<15x64xbf16>
    %c0_9 = arith.constant 0 : index
    %c64 = arith.constant 64 : index
    %9 = vector.load %arg5[%c0_9, %c64] : memref<16x256xbf16, #tpu.memory_space<vmem>>, vector<15x64xbf16>
    tpu.vector_store %arg5[%c0_9, %c64], %8 {strides = array<i32>} : memref<16x256xbf16, #tpu.memory_space<vmem>>, vector<15x64xbf16>,
    %cst_10 = arith.constant 0.000000e+00 : bf16
    %10 = vector.broadcast %cst_10 : bf16 to vector<1x64xbf16>
    %c14 = arith.constant 14 : index
    %c128 = arith.constant 128 : index
    %11 = vector.load %arg5[%c14, %c128] : memref<16x256xbf16, #tpu.memory_space<vmem>>, vector<1x64xbf16>
    tpu.vector_store %arg5[%c14, %c128], %10 {strides = array<i32>} : memref<16x256xbf16, #tpu.memory_space<vmem>>, vector<1x64xbf16>,
    %c0_11 = arith.constant 0 : index
    %c2 = arith.constant 2 : index
    %c0_12 = arith.constant 0 : index
    %12 = vector.load %arg1[%c0_11, %c2, %c0_12] : memref<1x16x64xbf16, #tpu.memory_space<vmem>>, vector<1x14x64xbf16>
    %13 = vector.shape_cast %12 : vector<1x14x64xbf16> to vector<14x64xbf16>
    %c0_13 = arith.constant 0 : index
    %c128_14 = arith.constant 128 : index
    %14 = vector.load %arg5[%c0_13, %c128_14] : memref<16x256xbf16, #tpu.memory_space<vmem>>, vector<14x64xbf16>
    tpu.vector_store %arg5[%c0_13, %c128_14], %13 {strides = array<i32>} : memref<16x256xbf16, #tpu.memory_space<vmem>>, vector<14x64xbf16>,
    %c0_15 = arith.constant 0 : index
    %c0_16 = arith.constant 0 : index
    %15 = vector.load %arg5[%c0_15, %c0_16] : memref<16x256xbf16, #tpu.memory_space<vmem>>, vector<16x256xbf16>
    %c0_17 = arith.constant 0 : index
    %c0_18 = arith.constant 0 : index
    %16 = vector.load %arg2[%c0_17, %c0_18] : memref<256x256xbf16, #tpu.memory_space<vmem>>, vector<256x256xbf16>
    %cst_19 = arith.constant dense<0.000000e+00> : vector<16x256xf32>
    %17 = tpu.matmul %15, %16, %cst_19 {dimension_numbers = #tpu.dot_dimension_numbers<[1], [0], [0], [1], [0, 0, 1, 1], [], []>} : vector<16x256xbf16>, vector<256x256xbf16>, vector<16x256xf32> -> vector<16x256xf32>
    %c0_20 = arith.constant 0 : index
    %c0_21 = arith.constant 0 : index
    %18 = vector.load %arg6[%c0_20, %c0_21] : memref<16x256xf32, #tpu.memory_space<vmem>>, vector<16x256xf32>
    tpu.vector_store %arg6[%c0_20, %c0_21], %17 {strides = array<i32>} : memref<16x256xf32, #tpu.memory_space<vmem>>, vector<16x256xf32>,
    %c0_22 = arith.constant 0 : index
    %c0_23 = arith.constant 0 : index
    %19 = vector.load %arg6[%c0_22, %c0_23] : memref<16x256xf32, #tpu.memory_space<vmem>>, vector<16x256xf32>
    %c0_24 = arith.constant 0 : index
    %c0_25 = arith.constant 0 : index
    %20 = vector.load %arg3[%c0_24, %c0_25] : memref<1x256xf32, #tpu.memory_space<vmem>>, vector<1x256xf32>
    %21 = vector.broadcast %20 : vector<1x256xf32> to vector<16x256xf32>
    %22 = arith.addf %19, %21 : vector<16x256xf32>
    %c0_26 = arith.constant 0 : index
    %c0_27 = arith.constant 0 : index
    %c0_28 = arith.constant 0 : index
    %23 = vector.load %arg4[%c0_26, %c0_27, %c0_28] : memref<1x16x256xf32, #tpu.memory_space<vmem>>, vector<1x16x256xf32>
    %24 = vector.shape_cast %23 : vector<1x16x256xf32> to vector<16x256xf32>
    %25 = vector.shape_cast %22 : vector<16x256xf32> to vector<1x16x256xf32>
    tpu.vector_store %arg4[%c0_26, %c0_27, %c0_28], %25 {strides = array<i32>} : memref<1x16x256xf32, #tpu.memory_space<vmem>>, vector<1x16x256xf32>,
    return
  }
  func.func @transform_0(%arg0: i32) -> (i32, i32, i32) {
    %c0_i32 = arith.constant 0 : i32
    %c0_i32_0 = arith.constant 0 : i32
    %c0_i32_1 = arith.constant 0 : i32
    return %arg0, %c0_i32, %c0_i32_0 : i32, i32, i32
  }
  func.func @transform_1(%arg0: i32) -> (i32, i32) {
    %c0_i32 = arith.constant 0 : i32
    %c0_i32_0 = arith.constant 0 : i32
    %c0_i32_1 = arith.constant 0 : i32
    return %c0_i32, %c0_i32_0 : i32, i32
  }
  func.func @transform_2(%arg0: i32) -> (i32, i32) {
    %c0_i32 = arith.constant 0 : i32
    %c0_i32_0 = arith.constant 0 : i32
    %c0_i32_1 = arith.constant 0 : i32
    return %c0_i32, %c0_i32_0 : i32, i32
  }
  func.func @transform_3(%arg0: i32) -> (i32, i32, i32) {
    %c0_i32 = arith.constant 0 : i32
    %c0_i32_0 = arith.constant 0 : i32
    %c0_i32_1 = arith.constant 0 : i32
    return %arg0, %c0_i32, %c0_i32_0 : i32, i32, i32
  }
}

</mosaic_0001>

<llo_original>
// kernel: tpu_custom_call.1
$region0: #{tpu_custom_call.1}
  #allocation0 [shape = 'u32[]', space=smem, size = 0x4, offset = 0x4, fixed_abs, tag = 'smem constant byte address 0x4 - core index']
  #allocation1 [shape = 'u32[72,128]{1,0:T(1,128)}', space=vmem, size = 0x9000, scoped, tag = 'internal scratch']
  #allocation2 [shape = 'bf16[16,256]{1,0:T(8,128)(2,1)}', space=vmem, size = 0x2000, scoped, tag = 'scratch operand']
  #allocation3 [shape = 'f32[16,256]{1,0:T(8,128)}', space=vmem, size = 0x4000, scoped, tag = 'scratch operand']
  %s0 = inlined_call_operand.hbm [shape: bf16[2,16,64], index: 0, kind: input, shape index: {}]
  %s1 = inlined_call_operand.hbm [shape: bf16[256,256], index: 1, kind: input, shape index: {}]
  %s2 = inlined_call_operand.hbm [shape: f32[1,256], index: 2, kind: input, shape index: {}]
  %s3 = inlined_call_operand.hbm [shape: f32[2,16,256], index: 3, kind: output, shape index: {}]
  %s4 = sld [smem:[#allocation0]]
  $region57: #{tpu_custom_call.1} parent=0
    _
  %s6 = ssub.s32 1, %s4
  %s7 = scalar_select 0, %s6, %s4
  $region1: #{tpu_custom_call.1} parent=0
    #allocation4 [shape = 'u8[8192]{0}', space=vmem, size = 0x2000, scoped, tag = 'input window, operand 0']
    #allocation5 [shape = 's32[2]{0}', space=sflag, size = 0x8, scoped, tag = 'scoped memory for tpu_custom_call.1']
    #allocation6 [shape = 's32[2]{0}', space=sflag, size = 0x8, scoped, tag = 'scoped memory for tpu_custom_call.1']
    #allocation7 [shape = 'u8[131072]{0}', space=vmem, size = 0x20000, scoped, tag = 'input window, operand 1, single buffered']
    #allocation8 [shape = 's32[1]{0}', space=sflag, size = 0x4, scoped, tag = 'scoped memory for tpu_custom_call.1']
    #allocation9 [shape = 'u8[1024]{0}', space=vmem, size = 0x400, scoped, tag = 'input window, operand 2, single buffered']
    #allocation10 [shape = 'u8[32768]{0}', space=vmem, size = 0x8000, scoped, tag = 'output window, operand 0']
    %8 = vsyncpa [#allocation5], 0
    %s9 = scalar_lea.sflag [#allocation5], 1
    %10 = vsyncpa %s9, 0
    %11 = vsyncpa [#allocation8], 0
    %12 = vsyncpa [#allocation6], 0
    %s13 = scalar_lea.sflag [#allocation6], 1
    %14 = vsyncpa %s13, 0
    loop: start=0, step=1, limit=4
    $region2: #{tpu_custom_call.1} parent=1 // loop_pre_header
      _
    $region3: #{tpu_custom_call.1} parent=1 // loop_header
      %s16 = sphi 0, %s20
      %p17 = scmp.ge.s32.totalorder %s16, 4
      %s26 = sphi 0, %s28
      %s29 = sphi 0, %s26
      %s30 = sphi 0, %s29
      %s46 = sphi 0, %s30
      %s50 = sphi 0, %s50
      %s52 = sphi 0, %s50
      %s53 = sphi 0, %s52
      %s67 = sphi 0, %s53
      %s71 = sphi 0, %s71
      %s73 = sphi 0, %s71
      %s74 = sphi 0, %s73
      %s88 = sphi 0, %s74
      %s94 = sphi 0, %s96
      %s97 = sphi 0, %s94
      %s98 = sphi 0, %s97
      %s114 = sphi 0, %s98
    $region4: #{tpu_custom_call.1} parent=1 // loop_header_branch
      %19 = sbr.rel (%p17) target = $region8
    $region5: #{tpu_custom_call.1} parent=1 // loop_body
      %s21 = ssub.s32 %s16, 1
      %s22 = ssub.s32 %s16, 2
      %s23 = sadd.s32 %s16, 1
      %s24 = ssub.s32 %s16, %s23
      %p25 = scmp.eq.s32.totalorder %s24, 0
      %s27 = sadd.s32 %s26, 1
      %s28 = scalar_select %p25, %s26, %s27
      %p31 = pneg %p25
      %p32 = scmp.eq.s32.totalorder %s16, 1
      %p33 = por %p31, %p32
      %p34 = scmp.ne.s32.totalorder %s26, %s29
      %p35 = scmp.eq.s32.totalorder %s16, 0
      %p36 = por %p34, %p35
      %p37 = scmp.ne.s32.totalorder %s26, %s29
      %p38 = scmp.eq.s32.totalorder %s21, 1
      %p39 = por %p37, %p38
      %p40 = scmp.ne.s32.totalorder %s29, %s30
      %p41 = scmp.eq.s32.totalorder %s21, 0
      %p42 = por %p40, %p41
      %p43 = scmp.ne.s32.totalorder %s29, %s30
      %p44 = scmp.eq.s32.totalorder %s22, 1
      %p45 = por %p43, %p44
      %p47 = scmp.ne.s32.totalorder %s30, %s46
      %p48 = scmp.eq.s32.totalorder %s22, 0
      %p49 = por %p47, %p48
      %s51 = sadd.s32 %s50, 1
      %p54 = scmp.eq.s32.totalorder %s16, 1
      %p55 = scmp.ne.s32.totalorder %s50, %s52
      %p56 = scmp.eq.s32.totalorder %s16, 0
      %p57 = por %p55, %p56
      %p58 = scmp.ne.s32.totalorder %s50, %s52
      %p59 = scmp.eq.s32.totalorder %s21, 1
      %p60 = por %p58, %p59
      %p61 = scmp.ne.s32.totalorder %s52, %s53
      %p62 = scmp.eq.s32.totalorder %s21, 0
      %p63 = por %p61, %p62
      %p64 = scmp.ne.s32.totalorder %s52, %s53
      %p65 = scmp.eq.s32.totalorder %s22, 1
      %p66 = por %p64, %p65
      %p68 = scmp.ne.s32.totalorder %s53, %s67
      %p69 = scmp.eq.s32.totalorder %s22, 0
      %p70 = por %p68, %p69
      %s72 = sadd.s32 %s71, 1
      %p75 = scmp.eq.s32.totalorder %s16, 1
      %p76 = scmp.ne.s32.totalorder %s71, %s73
      %p77 = scmp.eq.s32.totalorder %s16, 0
      %p78 = por %p76, %p77
      %p79 = scmp.ne.s32.totalorder %s71, %s73
      %p80 = scmp.eq.s32.totalorder %s21, 1
      %p81 = por %p79, %p80
      %p82 = scmp.ne.s32.totalorder %s73, %s74
      %p83 = scmp.eq.s32.totalorder %s21, 0
      %p84 = por %p82, %p83
      %p85 = scmp.ne.s32.totalorder %s73, %s74
      %p86 = scmp.eq.s32.totalorder %s22, 1
      %p87 = por %p85, %p86
      %p89 = scmp.ne.s32.totalorder %s74, %s88
      %p90 = scmp.eq.s32.totalorder %s22, 0
      %p91 = por %p89, %p90
      %s92 = ssub.s32 %s16, %s23
      %p93 = scmp.eq.s32.totalorder %s92, 0
      %s95 = sadd.s32 %s94, 1
      %s96 = scalar_select %p93, %s94, %s95
      %p99 = pneg %p93
      %p100 = scmp.eq.s32.totalorder %s16, 1
      %p101 = por %p99, %p100
      %p102 = scmp.ne.s32.totalorder %s94, %s97
      %p103 = scmp.eq.s32.totalorder %s16, 0
      %p104 = por %p102, %p103
      %p105 = scmp.ne.s32.totalorder %s94, %s97
      %p106 = scmp.eq.s32.totalorder %s21, 1
      %p107 = por %p105, %p106
      %p108 = scmp.ne.s32.totalorder %s97, %s98
      %p109 = scmp.eq.s32.totalorder %s21, 0
      %p110 = por %p108, %p109
      %p111 = scmp.ne.s32.totalorder %s97, %s98
      %p112 = scmp.eq.s32.totalorder %s22, 1
      %p113 = por %p111, %p112
      %p115 = scmp.ne.s32.totalorder %s98, %s114
      %p116 = scmp.eq.s32.totalorder %s22, 0
      %p117 = por %p115, %p116
      %p118 = scmp.le.s32.totalorder 1, %s16
      %p119 = scmp.lt.s32.totalorder %s16, 3
      %p120 = pnand %p118, %p119
      %p121 = pneg %p120
      // Predicated region
      $region9: #{tpu_custom_call.1} parent=5 // pred_check
        _
      $region10: #{tpu_custom_call.1} parent=5 // pred_check_branch
        %123 = sbr.rel (%p120) target = $region12
      $region11: #{tpu_custom_call.1} parent=5 // pred_region
        %s124 = ssub.s32 %s16, 1
        // Predicated region
        $region13: #{tpu_custom_call.1} parent=11 // pred_check
          %p125 = pneg %p63
        $region14: #{tpu_custom_call.1} parent=11 // pred_check_branch
          %127 = sbr.rel (%p125) target = $region16
        $region15: #{tpu_custom_call.1} parent=11 // pred_region
          %129 = vsyncadd [#allocation8], 0
          %s130 = sshll.u32 %s1, 4
          %s131 = int_to_ptr.hbm [resolvable:$true] %s130
          %s132 = sshll.u32 [#allocation7], 4
          %s133 = int_to_ptr.vmem [resolvable:$true] %s132
          %138 = dma.hbm_to_vmem [thread:$0]  %s131, 4096, %s133, [#allocation8], 128, 128, 8
        $region16: #{tpu_custom_call.1} parent=11 // pred_fallthru
          _
        // Predicated region
        $region17: #{tpu_custom_call.1} parent=11 // pred_check
          %p139 = pneg %p84
        $region18: #{tpu_custom_call.1} parent=11 // pred_check_branch
          %141 = sbr.rel (%p139) target = $region20
        $region19: #{tpu_custom_call.1} parent=11 // pred_region
          %143 = vsyncadd [#allocation8], 0
          %s145 = sshll.u32 %s2, 4
          %s146 = int_to_ptr.hbm [resolvable:$true] %s145
          %s147 = sshll.u32 [#allocation9], 4
          %s148 = int_to_ptr.vmem [resolvable:$true] %s147
          %150 = dma.hbm_to_vmem [thread:$0]  %s146, 32, %s148, [#allocation8]
        $region20: #{tpu_custom_call.1} parent=11 // pred_fallthru
          _
      $region12: #{tpu_custom_call.1} parent=5 // pred_fallthru
        _
      %p151 = scmp.lt.s32.totalorder %s16, 2
      // Predicated region
      $region21: #{tpu_custom_call.1} parent=5 // pred_check
        %p152 = pneg %p151
      $region22: #{tpu_custom_call.1} parent=5 // pred_check_branch
        %154 = sbr.rel (%p152) target = $region24
      $region23: #{tpu_custom_call.1} parent=5 // pred_region
        // Predicated region
        $region25: #{tpu_custom_call.1} parent=23 // pred_check
          %p155 = pneg %p36
        $region26: #{tpu_custom_call.1} parent=23 // pred_check_branch
          %157 = sbr.rel (%p155) target = $region28
        $region27: #{tpu_custom_call.1} parent=23 // pred_region
          %s158 = sand.u32 %s26, 1
          %s159 = scalar_lea.sflag [#allocation5], %s158
          %s160 = sand.u32 %s26, 1
          %s161 = smul.addr %s160, 8
          %s162 = scalar_lea.vmem [#allocation4], %s161
          %164 = vsyncadd %s159, 0
          %s165 = smul.addr %s16, 2
          %s166 = smul.addr %s165, 4
          %s167 = scalar_lea.hbm %s0, %s166
          %s168 = sshll.u32 %s167, 4
          %s169 = int_to_ptr.hbm [resolvable:$true] %s168
          %s170 = sshll.u32 %s162, 4
          %s171 = int_to_ptr.vmem [resolvable:$true] %s170
          %176 = dma.hbm_to_vmem [thread:$0]  %s169, 128, %s171, %s159, 64, 64, 4
        $region28: #{tpu_custom_call.1} parent=23 // pred_fallthru
          _
      $region24: #{tpu_custom_call.1} parent=5 // pred_fallthru
        _
      %p177 = scmp.le.s32.totalorder 1, %s16
      %p178 = scmp.lt.s32.totalorder %s16, 3
      %p179 = pnand %p177, %p178
      %p180 = pneg %p179
      // Predicated region
      $region29: #{tpu_custom_call.1} parent=5 // pred_check
        _
      $region30: #{tpu_custom_call.1} parent=5 // pred_check_branch
        %182 = sbr.rel (%p179) target = $region32
      $region31: #{tpu_custom_call.1} parent=5 // pred_region
        %s183 = ssub.s32 %s16, 1
        %s184 = sand.u32 %s29, 1
        %s185 = scalar_lea.sflag [#allocation5], %s184
        %s186 = sand.u32 %s29, 1
        %s187 = smul.addr %s186, 8
        %s188 = scalar_lea.vmem [#allocation4], %s187
        // Predicated region
        $region33: #{tpu_custom_call.1} parent=31 // pred_check
          %p189 = pneg %p42
        $region34: #{tpu_custom_call.1} parent=31 // pred_check_branch
          %191 = sbr.rel (%p189) target = $region36
        $region35: #{tpu_custom_call.1} parent=31 // pred_region
          %193 = dma.done %s185, 128
        $region36: #{tpu_custom_call.1} parent=31 // pred_fallthru
          _
        // Predicated region
        $region37: #{tpu_custom_call.1} parent=31 // pred_check
          %p194 = pneg %p63
        $region38: #{tpu_custom_call.1} parent=31 // pred_check_branch
          %196 = sbr.rel (%p194) target = $region40
        $region39: #{tpu_custom_call.1} parent=31 // pred_region
          %198 = dma.done [#allocation8], 4096
        $region40: #{tpu_custom_call.1} parent=31 // pred_fallthru
          _
        // Predicated region
        $region41: #{tpu_custom_call.1} parent=31 // pred_check
          %p199 = pneg %p84
        $region42: #{tpu_custom_call.1} parent=31 // pred_check_branch
          %201 = sbr.rel (%p199) target = $region44
        $region43: #{tpu_custom_call.1} parent=31 // pred_region
          %203 = dma.done [#allocation8], 32
        $region44: #{tpu_custom_call.1} parent=31 // pred_fallthru
          _
        %s204 = sand.u32 %s29, 1
        %s205 = scalar_lea.sflag [#allocation5], %s204
        %s206 = sand.u32 %s29, 1
        %s207 = smul.addr %s206, 8
        %s208 = scalar_lea.vmem [#allocation4], %s207
        %p209 = pneg %p42
        %p210 = pneg %p39
        %p211 = pneg %p63
        %p212 = pneg %p60
        %p213 = pneg %p84
        %p214 = pneg %p81
        %p215 = pneg %p110
        %p216 = pneg %p107
        %s217 = sand.u32 %s97, 1
        %s218 = scalar_lea.sflag [#allocation6], %s217
        %s219 = sand.u32 %s97, 1
        %s220 = smul.addr %s219, 32
        %s221 = scalar_lea.vmem [#allocation10], %s220
        %vm223 = vcmask 1043968
        %224 = vst.msk [vmem:[#allocation2 + $0x4] sm:$0xf] %vm223, 0
        %225 = vst.msk [vmem:[#allocation2 + $0xc] sm:$0xf] %vm223, 0
        %vm226 = vcmask 1043459
        %vm227 = vsmask.f32 7950
        %vm228 = vmand %vm226, %vm227
        %vm229 = vcmask 523271
        %vm230 = vsmask.f32 7966
        %vm231 = vmand %vm229, %vm230
        %vm232 = vmor %vm231, %vm228
        %v233 = vld [vmem:[#allocation2 + $0x8] sm:$0x88]
        %v234 = vsel %vm232, 0, %v233
        %235 = vst [vmem:[#allocation2 + $0x8] sm:$0x88] %v234
        %v236 = vld [vmem:[%s188] sm:$0xf]
        %v237 = vld [vmem:[%s188 + $0x4] sm:$0xf]
        %vm238 = vcmask 519168
        %239 = vst.msk [vmem:[#allocation2] sm:$0xf] %vm238, %v236
        %vm240 = vcmask 519168
        %vm241 = vsmask.f32 3328
        %vm242 = vmand %vm240, %vm241
        %v243 = vld [vmem:[#allocation2 + $0x8] sm:$0xf]
        %v244 = vsel %vm242, %v237, %v243
        %245 = vst [vmem:[#allocation2 + $0x8] sm:$0xf] %v244
        %v246 = vld [vmem:[%s188] sm:$0xf]
        %v247 = vld [vmem:[%s188 + $0x4] sm:$0xf]
        %vm248 = vsmask.f32 7440
        %vm249 = vmor %vm241, %vm248
        %v251 = vshrl.u32 %v246, 16
        %v253 = vrot.slane %v251, 4
        %v254 = vshll.u32 %v246, 16
        %v256 = vrot.slane %v254, 5
        %v257 = vor.u32 %v253, %v256
        %v258 = vrot.slane %v257, 4
        %v260 = vshll.u32 %v247, 16
        %v262 = vrot.slane %v260, 5
        %v263 = vsel %vm249, %v258, %v262
        %v264 = vshrl.u32 %v247, 16
        %v266 = vrot.slane %v264, 4
        %v267 = vor.u32 %v266, %v262
        %v268 = vrot.slane %v267, 4
        %269 = vrot.lane.b32.xlu0 %v263, 64
        %v270 = vpop.permute.xlu0 %269
        %271 = vrot.lane.b32.xlu0 %v268, 64
        %v272 = vpop.permute.xlu0 %271
        %275 = vst.msk [vmem:[#allocation2] sm:$0xf] %vm223, %v270
        %vm276 = vcmask 1043968
        %vm277 = vmand %vm276, %vm241
        %v278 = vld [vmem:[#allocation2 + $0x8] sm:$0xf]
        %v279 = vsel %vm277, %v272, %v278
        %280 = vst [vmem:[#allocation2 + $0x8] sm:$0xf] %v279
        %vm281 = vcmask 519171
        %vm282 = vmand %vm281, %vm241
        %v283 = vld [vmem:[#allocation2 + $0xc] sm:$0x8]
        %v284 = vsel %vm282, 0, %v283
        %285 = vst [vmem:[#allocation2 + $0xc] sm:$0x8] %v284
        %v286 = vld [vmem:[%s188] sm:$0xe]
        %v287 = vld [vmem:[%s188 + $0x4] sm:$0xf]
        %vm290 = vcmask 1042432
        %vm291 = vcmask 1046532
        %vm292 = vmor %vm290, %vm291
        %v293 = vrot.slane %v286, 5
        %v294 = vrot.slane %v293, 4
        %v295 = vrot.slane %v287, 5
        %v296 = vsel %vm292, %v294, %v295
        %v297 = vrot.slane %v295, 4
        %300 = vst.msk [vmem:[#allocation2 + $0x4] sm:$0xf] %vm238, %v296
        %vm301 = vcmask 518144
        %302 = vst.msk [vmem:[#allocation2 + $0xc] sm:$0x7] %vm301, %v297
        %v303 = vld [vmem:[#allocation2] sm:$0xff]
        %v304 = vld [vmem:[#allocation2 + $0x8] sm:$0xff]
        %v305 = vld [vmem:[#allocation7] sm:$0xff]
        %v306 = vld [vmem:[#allocation7 + $0x8] sm:$0xff]
        %v307 = vld [vmem:[#allocation7 + $0x10] sm:$0xff]
        %v308 = vld [vmem:[#allocation7 + $0x18] sm:$0xff]
        %v309 = vld [vmem:[#allocation7 + $0x20] sm:$0xff]
        %v310 = vld [vmem:[#allocation7 + $0x28] sm:$0xff]
        %v311 = vld [vmem:[#allocation7 + $0x30] sm:$0xff]
        %v312 = vld [vmem:[#allocation7 + $0x38] sm:$0xff]
        %v313 = vld [vmem:[#allocation7 + $0x40] sm:$0xff]
        %v314 = vld [vmem:[#allocation7 + $0x48] sm:$0xff]
        %v315 = vld [vmem:[#allocation7 + $0x50] sm:$0xff]
        %v316 = vld [vmem:[#allocation7 + $0x58] sm:$0xff]
        %v317 = vld [vmem:[#allocation7 + $0x60] sm:$0xff]
        %v318 = vld [vmem:[#allocation7 + $0x68] sm:$0xff]
        %v319 = vld [vmem:[#allocation7 + $0x70] sm:$0xff]
        %v320 = vld [vmem:[#allocation7 + $0x78] sm:$0xff]
        %v321 = vld [vmem:[#allocation7 + $0x80] sm:$0xff]
        %v322 = vld [vmem:[#allocation7 + $0x88] sm:$0xff]
        %v323 = vld [vmem:[#allocation7 + $0x90] sm:$0xff]
        %v324 = vld [vmem:[#allocation7 + $0x98] sm:$0xff]
        %v325 = vld [vmem:[#allocation7 + $0xa0] sm:$0xff]
        %v326 = vld [vmem:[#allocation7 + $0xa8] sm:$0xff]
        %v327 = vld [vmem:[#allocation7 + $0xb0] sm:$0xff]
        %v328 = vld [vmem:[#allocation7 + $0xb8] sm:$0xff]
        %v329 = vld [vmem:[#allocation7 + $0xc0] sm:$0xff]
        %v330 = vld [vmem:[#allocation7 + $0xc8] sm:$0xff]
        %v331 = vld [vmem:[#allocation7 + $0xd0] sm:$0xff]
        %v332 = vld [vmem:[#allocation7 + $0xd8] sm:$0xff]
        %v333 = vld [vmem:[#allocation7 + $0xe0] sm:$0xff]
        %v334 = vld [vmem:[#allocation7 + $0xe8] sm:$0xff]
        %v335 = vld [vmem:[#allocation7 + $0xf0] sm:$0xff]
        %v336 = vld [vmem:[#allocation7 + $0xf8] sm:$0xff]
        %v339 = vunpack.c.l.b16 %v303
        %v340 = vunpack.c.h.b16 %v303
        %v341 = vunpack.c.l.b16 %v304
        %v342 = vunpack.c.h.b16 %v304
        %v343 = vpack.c.b16 %v341, %v339
        %v344 = vpack.c.b16 %v342, %v340
        %v379 = vunpack.c.l.b16 %v305
        %v380 = vunpack.c.h.b16 %v305
        %v381 = vunpack.c.l.b16 %v306
        %v382 = vunpack.c.h.b16 %v306
        %v383 = vunpack.c.l.b16 %v307
        %v384 = vunpack.c.h.b16 %v307
        %v385 = vunpack.c.l.b16 %v308
        %v386 = vunpack.c.h.b16 %v308
        %v387 = vunpack.c.l.b16 %v309
        %v388 = vunpack.c.h.b16 %v309
        %v389 = vunpack.c.l.b16 %v310
        %v390 = vunpack.c.h.b16 %v310
        %v391 = vunpack.c.l.b16 %v311
        %v392 = vunpack.c.h.b16 %v311
        %v393 = vunpack.c.l.b16 %v312
        %v394 = vunpack.c.h.b16 %v312
        %v395 = vunpack.c.l.b16 %v313
        %v396 = vunpack.c.h.b16 %v313
        %v397 = vunpack.c.l.b16 %v314
        %v398 = vunpack.c.h.b16 %v314
        %v399 = vunpack.c.l.b16 %v315
        %v400 = vunpack.c.h.b16 %v315
        %v401 = vunpack.c.l.b16 %v316
        %v402 = vunpack.c.h.b16 %v316
        %v403 = vunpack.c.l.b16 %v317
        %v404 = vunpack.c.h.b16 %v317
        %v405 = vunpack.c.l.b16 %v318
        %v406 = vunpack.c.h.b16 %v318
        %v407 = vunpack.c.l.b16 %v319
        %v408 = vunpack.c.h.b16 %v319
        %v409 = vunpack.c.l.b16 %v320
        %v410 = vunpack.c.h.b16 %v320
        %v411 = vunpack.c.l.b16 %v321
        %v412 = vunpack.c.h.b16 %v321
        %v413 = vunpack.c.l.b16 %v322
        %v414 = vunpack.c.h.b16 %v322
        %v415 = vunpack.c.l.b16 %v323
        %v416 = vunpack.c.h.b16 %v323
        %v417 = vunpack.c.l.b16 %v324
        %v418 = vunpack.c.h.b16 %v324
        %v419 = vunpack.c.l.b16 %v325
        %v420 = vunpack.c.h.b16 %v325
        %v421 = vunpack.c.l.b16 %v326
        %v422 = vunpack.c.h.b16 %v326
        %v423 = vunpack.c.l.b16 %v327
        %v424 = vunpack.c.h.b16 %v327
        %v425 = vunpack.c.l.b16 %v328
        %v426 = vunpack.c.h.b16 %v328
        %v427 = vunpack.c.l.b16 %v329
        %v428 = vunpack.c.h.b16 %v329
        %v429 = vunpack.c.l.b16 %v330
        %v430 = vunpack.c.h.b16 %v330
        %v431 = vunpack.c.l.b16 %v331
        %v432 = vunpack.c.h.b16 %v331
        %v433 = vunpack.c.l.b16 %v332
        %v434 = vunpack.c.h.b16 %v332
        %v435 = vunpack.c.l.b16 %v333
        %v436 = vunpack.c.h.b16 %v333
        %v437 = vunpack.c.l.b16 %v334
        %v438 = vunpack.c.h.b16 %v334
        %v439 = vunpack.c.l.b16 %v335
        %v440 = vunpack.c.h.b16 %v335
        %v441 = vunpack.c.l.b16 %v336
        %v442 = vunpack.c.h.b16 %v336
        %v443 = vpack.c.b16 %v381, %v379
        %v444 = vpack.c.b16 %v382, %v380
        %v445 = vpack.c.b16 %v385, %v383
        %v446 = vpack.c.b16 %v386, %v384
        %v447 = vpack.c.b16 %v389, %v387
        %v448 = vpack.c.b16 %v390, %v388
        %v449 = vpack.c.b16 %v393, %v391
        %v450 = vpack.c.b16 %v394, %v392
        %v451 = vpack.c.b16 %v397, %v395
        %v452 = vpack.c.b16 %v398, %v396
        %v453 = vpack.c.b16 %v401, %v399
        %v454 = vpack.c.b16 %v402, %v400
        %v455 = vpack.c.b16 %v405, %v403
        %v456 = vpack.c.b16 %v406, %v404
        %v457 = vpack.c.b16 %v409, %v407
        %v458 = vpack.c.b16 %v410, %v408
        %v459 = vpack.c.b16 %v413, %v411
        %v460 = vpack.c.b16 %v414, %v412
        %v461 = vpack.c.b16 %v417, %v415
        %v462 = vpack.c.b16 %v418, %v416
        %v463 = vpack.c.b16 %v421, %v419
        %v464 = vpack.c.b16 %v422, %v420
        %v465 = vpack.c.b16 %v425, %v423
        %v466 = vpack.c.b16 %v426, %v424
        %v467 = vpack.c.b16 %v429, %v427
        %v468 = vpack.c.b16 %v430, %v428
        %v469 = vpack.c.b16 %v433, %v431
        %v470 = vpack.c.b16 %v434, %v432
        %v471 = vpack.c.b16 %v437, %v435
        %v472 = vpack.c.b16 %v438, %v436
        %v473 = vpack.c.b16 %v441, %v439
        %v474 = vpack.c.b16 %v442, %v440
        %507 = vmatpush.bf16.msra.mxu0 %v457
        %508 = vmatpush.bf16.msra.mxu0 %v455
        %509 = vmatpush.bf16.msra.mxu0 %v453
        %510 = vmatpush.bf16.msra.mxu0 %v451
        %511 = vmatpush.bf16.msra.mxu0 %v449
        %512 = vmatpush.bf16.msra.mxu0 %v447
        %513 = vmatpush.bf16.msra.mxu0 %v445
        %514 = vmatpush.bf16.msra.mxu0 %v443
        %515 = vmatmul.bf16.gmra.mxu0 %v343
        %v516 = vpop.f32.mrf.mxu0
        %v517 = vadd.f32 0.0, %v516
        %v518 = vpop.f32.mrf.mxu0
        %v519 = vadd.f32 0.0, %v518
        %520 = vdwg.mxu0
        %521 = vmatpush.bf16.msra.mxu0 %v473
        %522 = vmatpush.bf16.msra.mxu0 %v471
        %523 = vmatpush.bf16.msra.mxu0 %v469
        %524 = vmatpush.bf16.msra.mxu0 %v467
        %525 = vmatpush.bf16.msra.mxu0 %v465
        %526 = vmatpush.bf16.msra.mxu0 %v463
        %527 = vmatpush.bf16.msra.mxu0 %v461
        %528 = vmatpush.bf16.msra.mxu0 %v459
        %529 = vmatmul.bf16.gmra.mxu0 %v344
        %v530 = vpop.f32.mrf.mxu0
        %v531 = vadd.f32 %v517, %v530
        %v532 = vpop.f32.mrf.mxu0
        %v533 = vadd.f32 %v519, %v532
        %534 = vdwg.mxu0
        %535 = vmatpush.bf16.msra.mxu0 %v458
        %536 = vmatpush.bf16.msra.mxu0 %v456
        %537 = vmatpush.bf16.msra.mxu0 %v454
        %538 = vmatpush.bf16.msra.mxu0 %v452
        %539 = vmatpush.bf16.msra.mxu0 %v450
        %540 = vmatpush.bf16.msra.mxu0 %v448
        %541 = vmatpush.bf16.msra.mxu0 %v446
        %542 = vmatpush.bf16.msra.mxu0 %v444
        %543 = vmatmul.bf16.gmra.mxu0 %v343
        %v544 = vpop.f32.mrf.mxu0
        %v545 = vadd.f32 0.0, %v544
        %v546 = vpop.f32.mrf.mxu0
        %v547 = vadd.f32 0.0, %v546
        %548 = vdwg.mxu0
        %549 = vmatpush.bf16.msra.mxu0 %v474
        %550 = vmatpush.bf16.msra.mxu0 %v472
        %551 = vmatpush.bf16.msra.mxu0 %v470
        %552 = vmatpush.bf16.msra.mxu0 %v468
        %553 = vmatpush.bf16.msra.mxu0 %v466
        %554 = vmatpush.bf16.msra.mxu0 %v464
        %555 = vmatpush.bf16.msra.mxu0 %v462
        %556 = vmatpush.bf16.msra.mxu0 %v460
        %557 = vmatmul.bf16.gmra.mxu0 %v344
        %v558 = vpop.f32.mrf.mxu0
        %v559 = vadd.f32 %v545, %v558
        %v560 = vpop.f32.mrf.mxu0
        %v561 = vadd.f32 %v547, %v560
        %562 = vdwg.mxu0
        %563 = vst [vmem:[#allocation3] sm:$0xff] %v531
        %564 = vst [vmem:[#allocation3 + $0x8] sm:$0xff] %v559
        %565 = vst [vmem:[#allocation3 + $0x10] sm:$0xff] %v533
        %566 = vst [vmem:[#allocation3 + $0x18] sm:$0xff] %v561
        %v567 = vld [vmem:[#allocation3] sm:$0xff]
        %v568 = vld [vmem:[#allocation3 + $0x8] sm:$0xff]
        %v569 = vld [vmem:[#allocation3 + $0x10] sm:$0xff]
        %v570 = vld [vmem:[#allocation3 + $0x18] sm:$0xff]
        %v571 = vld [vmem:[#allocation9] sm:$0x3]
        %v573 = vperm.slane %v571, 0
        %v574 = vperm.slane %v571, 1
        %v577 = vadd.f32 %v567, %v573
        %v578 = vadd.f32 %v568, %v574
        %v579 = vadd.f32 %v569, %v573
        %v580 = vadd.f32 %v570, %v574
        %581 = vst [vmem:[%s221] sm:$0xff] %v577
        %582 = vst [vmem:[%s221 + $0x8] sm:$0xff] %v578
        %583 = vst [vmem:[%s221 + $0x10] sm:$0xff] %v579
        %584 = vst [vmem:[%s221 + $0x18] sm:$0xff] %v580
        %s585 = sand.u32 %s97, 1
        %s586 = scalar_lea.sflag [#allocation6], %s585
        %s587 = sand.u32 %s97, 1
        %s588 = smul.addr %s587, 32
        %s589 = scalar_lea.vmem [#allocation10], %s588
        // Predicated region
        $region45: #{tpu_custom_call.1} parent=31 // pred_check
          %p590 = pneg %p107
        $region46: #{tpu_custom_call.1} parent=31 // pred_check_branch
          %592 = sbr.rel (%p590) target = $region48
        $region47: #{tpu_custom_call.1} parent=31 // pred_region
          %594 = vsyncadd %s586, 0
          %s595 = smul.addr %s21, 4
          %s596 = smul.addr %s595, 8
          %s597 = scalar_lea.hbm %s3, %s596
          %s598 = sshll.u32 %s589, 4
          %s599 = int_to_ptr.vmem [resolvable:$true] %s598
          %s600 = sshll.u32 %s597, 4
          %s601 = int_to_ptr.hbm [resolvable:$true] %s600
          %606 = dma.vmem_to_hbm [thread:$0]  %s599, 512, %s601, %s586, 256, 256, 16
        $region48: #{tpu_custom_call.1} parent=31 // pred_fallthru
          _
      $region32: #{tpu_custom_call.1} parent=5 // pred_fallthru
        _
      %p607 = scmp.le.s32.totalorder 2, %s16
      // Predicated region
      $region49: #{tpu_custom_call.1} parent=5 // pred_check
        %p608 = pneg %p607
      $region50: #{tpu_custom_call.1} parent=5 // pred_check_branch
        %610 = sbr.rel (%p608) target = $region52
      $region51: #{tpu_custom_call.1} parent=5 // pred_region
        %s611 = ssub.s32 %s16, 2
        // Predicated region
        $region53: #{tpu_custom_call.1} parent=51 // pred_check
          %p612 = pneg %p113
        $region54: #{tpu_custom_call.1} parent=51 // pred_check_branch
          %614 = sbr.rel (%p612) target = $region56
        $region55: #{tpu_custom_call.1} parent=51 // pred_region
          %s615 = sand.u32 %s98, 1
          %s616 = scalar_lea.sflag [#allocation6], %s615
          %s617 = sand.u32 %s98, 1
          %s618 = smul.addr %s617, 32
          %s619 = scalar_lea.vmem [#allocation10], %s618
          %621 = dma.done %s616, 512
        $region56: #{tpu_custom_call.1} parent=51 // pred_fallthru
          _
      $region52: #{tpu_custom_call.1} parent=5 // pred_fallthru
        _
    $region6: #{tpu_custom_call.1} parent=1 // loop_footer
      %s20 = sadd.s32 1, %s16
    $region7: #{tpu_custom_call.1} parent=1 // loop_footer_branch
      %15 = sbr.rel target = $region3
    $region8: #{tpu_custom_call.1} parent=1 // loop_exit
      _
    %622 = vsyncpa [#allocation5], 1
    %s623 = scalar_lea.sflag [#allocation5], 1
    %624 = vsyncpa %s623, 1
    %625 = vsyncpa [#allocation8], 1
    %626 = vsyncpa [#allocation6], 1
    %s627 = scalar_lea.sflag [#allocation6], 1
    %628 = vsyncpa %s627, 1

// kernel: tpu_custom_call.1
$region0: #{tpu_custom_call.1}
  #allocation0 [shape = 'u32[]', space=smem, size = 0x4, offset = 0x4, fixed_abs, tag = 'smem constant byte address 0x4 - core index']
  #allocation1 [shape = 'u32[72,128]{1,0:T(1,128)}', space=vmem, size = 0x9000, scoped, tag = 'internal scratch']
  #allocation2 [shape = 'bf16[16,256]{1,0:T(8,128)(2,1)}', space=vmem, size = 0x2000, scoped, tag = 'scratch operand']
  #allocation3 [shape = 'f32[16,256]{1,0:T(8,128)}', space=vmem, size = 0x4000, scoped, tag = 'scratch operand']
  %s0 = inlined_call_operand.hbm [shape: bf16[2,16,64], index: 0, kind: input, shape index: {}]
  %s1 = inlined_call_operand.hbm [shape: bf16[256,256], index: 1, kind: input, shape index: {}]
  %s2 = inlined_call_operand.hbm [shape: f32[1,256], index: 2, kind: input, shape index: {}]
  %s3 = inlined_call_operand.hbm [shape: f32[2,16,256], index: 3, kind: output, shape index: {}]
  %s4 = sld [smem:[#allocation0]]
  $region57: #{tpu_custom_call.1} parent=0
    _
  %s6 = ssub.s32 1, %s4
  %s7 = scalar_select 0, %s6, %s4
  $region1: #{tpu_custom_call.1} parent=0
    #allocation4 [shape = 'u8[8192]{0}', space=vmem, size = 0x2000, scoped, tag = 'input window, operand 0']
    #allocation5 [shape = 's32[2]{0}', space=sflag, size = 0x8, scoped, tag = 'scoped memory for tpu_custom_call.1']
    #allocation6 [shape = 's32[2]{0}', space=sflag, size = 0x8, scoped, tag = 'scoped memory for tpu_custom_call.1']
    #allocation7 [shape = 'u8[131072]{0}', space=vmem, size = 0x20000, scoped, tag = 'input window, operand 1, single buffered']
    #allocation8 [shape = 's32[1]{0}', space=sflag, size = 0x4, scoped, tag = 'scoped memory for tpu_custom_call.1']
    #allocation9 [shape = 'u8[1024]{0}', space=vmem, size = 0x400, scoped, tag = 'input window, operand 2, single buffered']
    #allocation10 [shape = 'u8[32768]{0}', space=vmem, size = 0x8000, scoped, tag = 'output window, operand 0']
    %8 = vsyncpa [#allocation5], 0
    %s9 = scalar_lea.sflag [#allocation5], 1
    %10 = vsyncpa %s9, 0
    %11 = vsyncpa [#allocation8], 0
    %12 = vsyncpa [#allocation6], 0
    %s13 = scalar_lea.sflag [#allocation6], 1
    %14 = vsyncpa %s13, 0
    loop: start=0, step=1, limit=4
    $region2: #{tpu_custom_call.1} parent=1 // loop_pre_header
      _
    $region3: #{tpu_custom_call.1} parent=1 // loop_header
      %s16 = sphi 0, %s20
      %p17 = scmp.ge.s32.totalorder %s16, 4
      %s26 = sphi 0, %s28
      %s29 = sphi 0, %s26
      %s30 = sphi 0, %s29
      %s46 = sphi 0, %s30
      %s50 = sphi 0, %s50
      %s52 = sphi 0, %s50
      %s53 = sphi 0, %s52
      %s67 = sphi 0, %s53
      %s71 = sphi 0, %s71
      %s73 = sphi 0, %s71
      %s74 = sphi 0, %s73
      %s88 = sphi 0, %s74
      %s94 = sphi 0, %s96
      %s97 = sphi 0, %s94
      %s98 = sphi 0, %s97
      %s114 = sphi 0, %s98
    $region4: #{tpu_custom_call.1} parent=1 // loop_header_branch
      %19 = sbr.rel (%p17) target = $region8
    $region5: #{tpu_custom_call.1} parent=1 // loop_body
      %s21 = ssub.s32 %s16, 1
      %s22 = ssub.s32 %s16, 2
      %s23 = sadd.s32 %s16, 1
      %s24 = ssub.s32 %s16, %s23
      %p25 = scmp.eq.s32.totalorder %s24, 0
      %s27 = sadd.s32 %s26, 1
      %s28 = scalar_select %p25, %s26, %s27
      %p31 = pneg %p25
      %p32 = scmp.eq.s32.totalorder %s16, 1
      %p33 = por %p31, %p32
      %p34 = scmp.ne.s32.totalorder %s26, %s29
      %p35 = scmp.eq.s32.totalorder %s16, 0
      %p36 = por %p34, %p35
      %p37 = scmp.ne.s32.totalorder %s26, %s29
      %p38 = scmp.eq.s32.totalorder %s21, 1
      %p39 = por %p37, %p38
      %p40 = scmp.ne.s32.totalorder %s29, %s30
      %p41 = scmp.eq.s32.totalorder %s21, 0
      %p42 = por %p40, %p41
      %p43 = scmp.ne.s32.totalorder %s29, %s30
      %p44 = scmp.eq.s32.totalorder %s22, 1
      %p45 = por %p43, %p44
      %p47 = scmp.ne.s32.totalorder %s30, %s46
      %p48 = scmp.eq.s32.totalorder %s22, 0
      %p49 = por %p47, %p48
      %s51 = sadd.s32 %s50, 1
      %p54 = scmp.eq.s32.totalorder %s16, 1
      %p55 = scmp.ne.s32.totalorder %s50, %s52
      %p56 = scmp.eq.s32.totalorder %s16, 0
      %p57 = por %p55, %p56
      %p58 = scmp.ne.s32.totalorder %s50, %s52
      %p59 = scmp.eq.s32.totalorder %s21, 1
      %p60 = por %p58, %p59
      %p61 = scmp.ne.s32.totalorder %s52, %s53
      %p62 = scmp.eq.s32.totalorder %s21, 0
      %p63 = por %p61, %p62
      %p64 = scmp.ne.s32.totalorder %s52, %s53
      %p65 = scmp.eq.s32.totalorder %s22, 1
      %p66 = por %p64, %p65
      %p68 = scmp.ne.s32.totalorder %s53, %s67
      %p69 = scmp.eq.s32.totalorder %s22, 0
      %p70 = por %p68, %p69
      %s72 = sadd.s32 %s71, 1
      %p75 = scmp.eq.s32.totalorder %s16, 1
      %p76 = scmp.ne.s32.totalorder %s71, %s73
      %p77 = scmp.eq.s32.totalorder %s16, 0
      %p78 = por %p76, %p77
      %p79 = scmp.ne.s32.totalorder %s71, %s73
      %p80 = scmp.eq.s32.totalorder %s21, 1
      %p81 = por %p79, %p80
      %p82 = scmp.ne.s32.totalorder %s73, %s74
      %p83 = scmp.eq.s32.totalorder %s21, 0
      %p84 = por %p82, %p83
      %p85 = scmp.ne.s32.totalorder %s73, %s74
      %p86 = scmp.eq.s32.totalorder %s22, 1
      %p87 = por %p85, %p86
      %p89 = scmp.ne.s32.totalorder %s74, %s88
      %p90 = scmp.eq.s32.totalorder %s22, 0
      %p91 = por %p89, %p90
      %s92 = ssub.s32 %s16, %s23
      %p93 = scmp.eq.s32.totalorder %s92, 0
      %s95 = sadd.s32 %s94, 1
      %s96 = scalar_select %p93, %s94, %s95
      %p99 = pneg %p93
      %p100 = scmp.eq.s32.totalorder %s16, 1
      %p101 = por %p99, %p100
      %p102 = scmp.ne.s32.totalorder %s94, %s97
      %p103 = scmp.eq.s32.totalorder %s16, 0
      %p104 = por %p102, %p103
      %p105 = scmp.ne.s32.totalorder %s94, %s97
      %p106 = scmp.eq.s32.totalorder %s21, 1
      %p107 = por %p105, %p106
      %p108 = scmp.ne.s32.totalorder %s97, %s98
      %p109 = scmp.eq.s32.totalorder %s21, 0
      %p110 = por %p108, %p109
      %p111 = scmp.ne.s32.totalorder %s97, %s98
      %p112 = scmp.eq.s32.totalorder %s22, 1
      %p113 = por %p111, %p112
      %p115 = scmp.ne.s32.totalorder %s98, %s114
      %p116 = scmp.eq.s32.totalorder %s22, 0
      %p117 = por %p115, %p116
      %p118 = scmp.le.s32.totalorder 1, %s16
      %p119 = scmp.lt.s32.totalorder %s16, 3
      %p120 = pnand %p118, %p119
      %p121 = pneg %p120
      // Predicated region
      $region9: #{tpu_custom_call.1} parent=5 // pred_check
        _
      $region10: #{tpu_custom_call.1} parent=5 // pred_check_branch
        %123 = sbr.rel (%p120) target = $region12
      $region11: #{tpu_custom_call.1} parent=5 // pred_region
        %s124 = ssub.s32 %s16, 1
        // Predicated region
        $region13: #{tpu_custom_call.1} parent=11 // pred_check
          %p125 = pneg %p63
        $region14: #{tpu_custom_call.1} parent=11 // pred_check_branch
          %127 = sbr.rel (%p125) target = $region16
        $region15: #{tpu_custom_call.1} parent=11 // pred_region
          %129 = vsyncadd [#allocation8], 0
          %s130 = sshll.u32 %s1, 4
          %s131 = int_to_ptr.hbm [resolvable:$true] %s130
          %s132 = sshll.u32 [#allocation7], 4
          %s133 = int_to_ptr.vmem [resolvable:$true] %s132
          %138 = dma.hbm_to_vmem [thread:$0]  %s131, 4096, %s133, [#allocation8], 128, 128, 8
        $region16: #{tpu_custom_call.1} parent=11 // pred_fallthru
          _
        // Predicated region
        $region17: #{tpu_custom_call.1} parent=11 // pred_check
          %p139 = pneg %p84
        $region18: #{tpu_custom_call.1} parent=11 // pred_check_branch
          %141 = sbr.rel (%p139) target = $region20
        $region19: #{tpu_custom_call.1} parent=11 // pred_region
          %143 = vsyncadd [#allocation8], 0
          %s145 = sshll.u32 %s2, 4
          %s146 = int_to_ptr.hbm [resolvable:$true] %s145
          %s147 = sshll.u32 [#allocation9], 4
          %s148 = int_to_ptr.vmem [resolvable:$true] %s147
          %150 = dma.hbm_to_vmem [thread:$0]  %s146, 32, %s148, [#allocation8]
        $region20: #{tpu_custom_call.1} parent=11 // pred_fallthru
          _
      $region12: #{tpu_custom_call.1} parent=5 // pred_fallthru
        _
      %p151 = scmp.lt.s32.totalorder %s16, 2
      // Predicated region
      $region21: #{tpu_custom_call.1} parent=5 // pred_check
        %p152 = pneg %p151
      $region22: #{tpu_custom_call.1} parent=5 // pred_check_branch
        %154 = sbr.rel (%p152) target = $region24
      $region23: #{tpu_custom_call.1} parent=5 // pred_region
        // Predicated region
        $region25: #{tpu_custom_call.1} parent=23 // pred_check
          %p155 = pneg %p36
        $region26: #{tpu_custom_call.1} parent=23 // pred_check_branch
          %157 = sbr.rel (%p155) target = $region28
        $region27: #{tpu_custom_call.1} parent=23 // pred_region
          %s158 = sand.u32 %s26, 1
          %s159 = scalar_lea.sflag [#allocation5], %s158
          %s160 = sand.u32 %s26, 1
          %s161 = smul.addr %s160, 8
          %s162 = scalar_lea.vmem [#allocation4], %s161
          %164 = vsyncadd %s159, 0
          %s165 = smul.addr %s16, 2
          %s166 = smul.addr %s165, 4
          %s167 = scalar_lea.hbm %s0, %s166
          %s168 = sshll.u32 %s167, 4
          %s169 = int_to_ptr.hbm [resolvable:$true] %s168
          %s170 = sshll.u32 %s162, 4
          %s171 = int_to_ptr.vmem [resolvable:$true] %s170
          %176 = dma.hbm_to_vmem [thread:$0]  %s169, 128, %s171, %s159, 64, 64, 4
        $region28: #{tpu_custom_call.1} parent=23 // pred_fallthru
          _
      $region24: #{tpu_custom_call.1} parent=5 // pred_fallthru
        _
      %p177 = scmp.le.s32.totalorder 1, %s16
      %p178 = scmp.lt.s32.totalorder %s16, 3
      %p179 = pnand %p177, %p178
      %p180 = pneg %p179
      // Predicated region
      $region29: #{tpu_custom_call.1} parent=5 // pred_check
        _
      $region30: #{tpu_custom_call.1} parent=5 // pred_check_branch
        %182 = sbr.rel (%p179) target = $region32
      $region31: #{tpu_custom_call.1} parent=5 // pred_region
        %s183 = ssub.s32 %s16, 1
        %s184 = sand.u32 %s29, 1
        %s185 = scalar_lea.sflag [#allocation5], %s184
        %s186 = sand.u32 %s29, 1
        %s187 = smul.addr %s186, 8
        %s188 = scalar_lea.vmem [#allocation4], %s187
        // Predicated region
        $region33: #{tpu_custom_call.1} parent=31 // pred_check
          %p189 = pneg %p42
        $region34: #{tpu_custom_call.1} parent=31 // pred_check_branch
          %191 = sbr.rel (%p189) target = $region36
        $region35: #{tpu_custom_call.1} parent=31 // pred_region
          %193 = dma.done %s185, 128
        $region36: #{tpu_custom_call.1} parent=31 // pred_fallthru
          _
        // Predicated region
        $region37: #{tpu_custom_call.1} parent=31 // pred_check
          %p194 = pneg %p63
        $region38: #{tpu_custom_call.1} parent=31 // pred_check_branch
          %196 = sbr.rel (%p194) target = $region40
        $region39: #{tpu_custom_call.1} parent=31 // pred_region
          %198 = dma.done [#allocation8], 4096
        $region40: #{tpu_custom_call.1} parent=31 // pred_fallthru
          _
        // Predicated region
        $region41: #{tpu_custom_call.1} parent=31 // pred_check
          %p199 = pneg %p84
        $region42: #{tpu_custom_call.1} parent=31 // pred_check_branch
          %201 = sbr.rel (%p199) target = $region44
        $region43: #{tpu_custom_call.1} parent=31 // pred_region
          %203 = dma.done [#allocation8], 32
        $region44: #{tpu_custom_call.1} parent=31 // pred_fallthru
          _
        %s204 = sand.u32 %s29, 1
        %s205 = scalar_lea.sflag [#allocation5], %s204
        %s206 = sand.u32 %s29, 1
        %s207 = smul.addr %s206, 8
        %s208 = scalar_lea.vmem [#allocation4], %s207
        %p209 = pneg %p42
        %p210 = pneg %p39
        %p211 = pneg %p63
        %p212 = pneg %p60
        %p213 = pneg %p84
        %p214 = pneg %p81
        %p215 = pneg %p110
        %p216 = pneg %p107
        %s217 = sand.u32 %s97, 1
        %s218 = scalar_lea.sflag [#allocation6], %s217
        %s219 = sand.u32 %s97, 1
        %s220 = smul.addr %s219, 32
        %s221 = scalar_lea.vmem [#allocation10], %s220
        %vm223 = vcmask 1043968
        %224 = vst.msk [vmem:[#allocation2 + $0x4] sm:$0xf] %vm223, 0
        %225 = vst.msk [vmem:[#allocation2 + $0xc] sm:$0xf] %vm223, 0
        %vm226 = vcmask 1043459
        %vm227 = vsmask.f32 7950
        %vm228 = vmand %vm226, %vm227
        %vm229 = vcmask 523271
        %vm230 = vsmask.f32 7966
        %vm231 = vmand %vm229, %vm230
        %vm232 = vmor %vm231, %vm228
        %v233 = vld [vmem:[#allocation2 + $0x8] sm:$0x88]
        %v234 = vsel %vm232, 0, %v233
        %235 = vst [vmem:[#allocation2 + $0x8] sm:$0x88] %v234
        %v236 = vld [vmem:[%s188] sm:$0xf]
        %v237 = vld [vmem:[%s188 + $0x4] sm:$0xf]
        %vm238 = vcmask 519168
        %239 = vst.msk [vmem:[#allocation2] sm:$0xf] %vm238, %v236
        %vm240 = vcmask 519168
        %vm241 = vsmask.f32 3328
        %vm242 = vmand %vm240, %vm241
        %v243 = vld [vmem:[#allocation2 + $0x8] sm:$0xf]
        %v244 = vsel %vm242, %v237, %v243
        %245 = vst [vmem:[#allocation2 + $0x8] sm:$0xf] %v244
        %v246 = vld [vmem:[%s188] sm:$0xf]
        %v247 = vld [vmem:[%s188 + $0x4] sm:$0xf]
        %vm248 = vsmask.f32 7440
        %vm249 = vmor %vm241, %vm248
        %v251 = vshrl.u32 %v246, 16
        %v253 = vrot.slane %v251, 4
        %v254 = vshll.u32 %v246, 16
        %v256 = vrot.slane %v254, 5
        %v257 = vor.u32 %v253, %v256
        %v258 = vrot.slane %v257, 4
        %v260 = vshll.u32 %v247, 16
        %v262 = vrot.slane %v260, 5
        %v263 = vsel %vm249, %v258, %v262
        %v264 = vshrl.u32 %v247, 16
        %v266 = vrot.slane %v264, 4
        %v267 = vor.u32 %v266, %v262
        %v268 = vrot.slane %v267, 4
        %269 = vrot.lane.b32.xlu0 %v263, 64
        %v270 = vpop.permute.xlu0 %269
        %271 = vrot.lane.b32.xlu0 %v268, 64
        %v272 = vpop.permute.xlu0 %271
        %275 = vst.msk [vmem:[#allocation2] sm:$0xf] %vm223, %v270
        %vm276 = vcmask 1043968
        %vm277 = vmand %vm276, %vm241
        %v278 = vld [vmem:[#allocation2 + $0x8] sm:$0xf]
        %v279 = vsel %vm277, %v272, %v278
        %280 = vst [vmem:[#allocation2 + $0x8] sm:$0xf] %v279
        %vm281 = vcmask 519171
        %vm282 = vmand %vm281, %vm241
        %v283 = vld [vmem:[#allocation2 + $0xc] sm:$0x8]
        %v284 = vsel %vm282, 0, %v283
        %285 = vst [vmem:[#allocation2 + $0xc] sm:$0x8] %v284
        %v286 = vld [vmem:[%s188] sm:$0xe]
        %v287 = vld [vmem:[%s188 + $0x4] sm:$0xf]
        %vm290 = vcmask 1042432
        %vm291 = vcmask 1046532
        %vm292 = vmor %vm290, %vm291
        %v293 = vrot.slane %v286, 5
        %v294 = vrot.slane %v293, 4
        %v295 = vrot.slane %v287, 5
        %v296 = vsel %vm292, %v294, %v295
        %v297 = vrot.slane %v295, 4
        %300 = vst.msk [vmem:[#allocation2 + $0x4] sm:$0xf] %vm238, %v296
        %vm301 = vcmask 518144
        %302 = vst.msk [vmem:[#allocation2 + $0xc] sm:$0x7] %vm301, %v297
        %v303 = vld [vmem:[#allocation2] sm:$0xff]
        %v304 = vld [vmem:[#allocation2 + $0x8] sm:$0xff]
        %v305 = vld [vmem:[#allocation7] sm:$0xff]
        %v306 = vld [vmem:[#allocation7 + $0x8] sm:$0xff]
        %v307 = vld [vmem:[#allocation7 + $0x10] sm:$0xff]
        %v308 = vld [vmem:[#allocation7 + $0x18] sm:$0xff]
        %v309 = vld [vmem:[#allocation7 + $0x20] sm:$0xff]
        %v310 = vld [vmem:[#allocation7 + $0x28] sm:$0xff]
        %v311 = vld [vmem:[#allocation7 + $0x30] sm:$0xff]
        %v312 = vld [vmem:[#allocation7 + $0x38] sm:$0xff]
        %v313 = vld [vmem:[#allocation7 + $0x40] sm:$0xff]
        %v314 = vld [vmem:[#allocation7 + $0x48] sm:$0xff]
        %v315 = vld [vmem:[#allocation7 + $0x50] sm:$0xff]
        %v316 = vld [vmem:[#allocation7 + $0x58] sm:$0xff]
        %v317 = vld [vmem:[#allocation7 + $0x60] sm:$0xff]
        %v318 = vld [vmem:[#allocation7 + $0x68] sm:$0xff]
        %v319 = vld [vmem:[#allocation7 + $0x70] sm:$0xff]
        %v320 = vld [vmem:[#allocation7 + $0x78] sm:$0xff]
        %v321 = vld [vmem:[#allocation7 + $0x80] sm:$0xff]
        %v322 = vld [vmem:[#allocation7 + $0x88] sm:$0xff]
        %v323 = vld [vmem:[#allocation7 + $0x90] sm:$0xff]
        %v324 = vld [vmem:[#allocation7 + $0x98] sm:$0xff]
        %v325 = vld [vmem:[#allocation7 + $0xa0] sm:$0xff]
        %v326 = vld [vmem:[#allocation7 + $0xa8] sm:$0xff]
        %v327 = vld [vmem:[#allocation7 + $0xb0] sm:$0xff]
        %v328 = vld [vmem:[#allocation7 + $0xb8] sm:$0xff]
        %v329 = vld [vmem:[#allocation7 + $0xc0] sm:$0xff]
        %v330 = vld [vmem:[#allocation7 + $0xc8] sm:$0xff]
        %v331 = vld [vmem:[#allocation7 + $0xd0] sm:$0xff]
        %v332 = vld [vmem:[#allocation7 + $0xd8] sm:$0xff]
        %v333 = vld [vmem:[#allocation7 + $0xe0] sm:$0xff]
        %v334 = vld [vmem:[#allocation7 + $0xe8] sm:$0xff]
        %v335 = vld [vmem:[#allocation7 + $0xf0] sm:$0xff]
        %v336 = vld [vmem:[#allocation7 + $0xf8] sm:$0xff]
        %v339 = vunpack.c.l.b16 %v303
        %v340 = vunpack.c.h.b16 %v303
        %v341 = vunpack.c.l.b16 %v304
        %v342 = vunpack.c.h.b16 %v304
        %v343 = vpack.c.b16 %v341, %v339
        %v344 = vpack.c.b16 %v342, %v340
        %v379 = vunpack.c.l.b16 %v305
        %v380 = vunpack.c.h.b16 %v305
        %v381 = vunpack.c.l.b16 %v306
        %v382 = vunpack.c.h.b16 %v306
        %v383 = vunpack.c.l.b16 %v307
        %v384 = vunpack.c.h.b16 %v307
        %v385 = vunpack.c.l.b16 %v308
        %v386 = vunpack.c.h.b16 %v308
        %v387 = vunpack.c.l.b16 %v309
        %v388 = vunpack.c.h.b16 %v309
        %v389 = vunpack.c.l.b16 %v310
        %v390 = vunpack.c.h.b16 %v310
        %v391 = vunpack.c.l.b16 %v311
        %v392 = vunpack.c.h.b16 %v311
        %v393 = vunpack.c.l.b16 %v312
        %v394 = vunpack.c.h.b16 %v312
        %v395 = vunpack.c.l.b16 %v313
        %v396 = vunpack.c.h.b16 %v313
        %v397 = vunpack.c.l.b16 %v314
        %v398 = vunpack.c.h.b16 %v314
        %v399 = vunpack.c.l.b16 %v315
        %v400 = vunpack.c.h.b16 %v315
        %v401 = vunpack.c.l.b16 %v316
        %v402 = vunpack.c.h.b16 %v316
        %v403 = vunpack.c.l.b16 %v317
        %v404 = vunpack.c.h.b16 %v317
        %v405 = vunpack.c.l.b16 %v318
        %v406 = vunpack.c.h.b16 %v318
        %v407 = vunpack.c.l.b16 %v319
        %v408 = vunpack.c.h.b16 %v319
        %v409 = vunpack.c.l.b16 %v320
        %v410 = vunpack.c.h.b16 %v320
        %v411 = vunpack.c.l.b16 %v321
        %v412 = vunpack.c.h.b16 %v321
        %v413 = vunpack.c.l.b16 %v322
        %v414 = vunpack.c.h.b16 %v322
        %v415 = vunpack.c.l.b16 %v323
        %v416 = vunpack.c.h.b16 %v323
        %v417 = vunpack.c.l.b16 %v324
        %v418 = vunpack.c.h.b16 %v324
        %v419 = vunpack.c.l.b16 %v325
        %v420 = vunpack.c.h.b16 %v325
        %v421 = vunpack.c.l.b16 %v326
        %v422 = vunpack.c.h.b16 %v326
        %v423 = vunpack.c.l.b16 %v327
        %v424 = vunpack.c.h.b16 %v327
        %v425 = vunpack.c.l.b16 %v328
        %v426 = vunpack.c.h.b16 %v328
        %v427 = vunpack.c.l.b16 %v329
        %v428 = vunpack.c.h.b16 %v329
        %v429 = vunpack.c.l.b16 %v330
        %v430 = vunpack.c.h.b16 %v330
        %v431 = vunpack.c.l.b16 %v331
        %v432 = vunpack.c.h.b16 %v331
        %v433 = vunpack.c.l.b16 %v332
        %v434 = vunpack.c.h.b16 %v332
        %v435 = vunpack.c.l.b16 %v333
        %v436 = vunpack.c.h.b16 %v333
        %v437 = vunpack.c.l.b16 %v334
        %v438 = vunpack.c.h.b16 %v334
        %v439 = vunpack.c.l.b16 %v335
        %v440 = vunpack.c.h.b16 %v335
        %v441 = vunpack.c.l.b16 %v336
        %v442 = vunpack.c.h.b16 %v336
        %v443 = vpack.c.b16 %v381, %v379
        %v444 = vpack.c.b16 %v382, %v380
        %v445 = vpack.c.b16 %v385, %v383
        %v446 = vpack.c.b16 %v386, %v384
        %v447 = vpack.c.b16 %v389, %v387
        %v448 = vpack.c.b16 %v390, %v388
        %v449 = vpack.c.b16 %v393, %v391
        %v450 = vpack.c.b16 %v394, %v392
        %v451 = vpack.c.b16 %v397, %v395
        %v452 = vpack.c.b16 %v398, %v396
        %v453 = vpack.c.b16 %v401, %v399
        %v454 = vpack.c.b16 %v402, %v400
        %v455 = vpack.c.b16 %v405, %v403
        %v456 = vpack.c.b16 %v406, %v404
        %v457 = vpack.c.b16 %v409, %v407
        %v458 = vpack.c.b16 %v410, %v408
        %v459 = vpack.c.b16 %v413, %v411
        %v460 = vpack.c.b16 %v414, %v412
        %v461 = vpack.c.b16 %v417, %v415
        %v462 = vpack.c.b16 %v418, %v416
        %v463 = vpack.c.b16 %v421, %v419
        %v464 = vpack.c.b16 %v422, %v420
        %v465 = vpack.c.b16 %v425, %v423
        %v466 = vpack.c.b16 %v426, %v424
        %v467 = vpack.c.b16 %v429, %v427
        %v468 = vpack.c.b16 %v430, %v428
        %v469 = vpack.c.b16 %v433, %v431
        %v470 = vpack.c.b16 %v434, %v432
        %v471 = vpack.c.b16 %v437, %v435
        %v472 = vpack.c.b16 %v438, %v436
        %v473 = vpack.c.b16 %v441, %v439
        %v474 = vpack.c.b16 %v442, %v440
        %507 = vmatpush.bf16.msra.mxu0 %v457
        %508 = vmatpush.bf16.msra.mxu0 %v455
        %509 = vmatpush.bf16.msra.mxu0 %v453
        %510 = vmatpush.bf16.msra.mxu0 %v451
        %511 = vmatpush.bf16.msra.mxu0 %v449
        %512 = vmatpush.bf16.msra.mxu0 %v447
        %513 = vmatpush.bf16.msra.mxu0 %v445
        %514 = vmatpush.bf16.msra.mxu0 %v443
        %515 = vmatmul.bf16.gmra.mxu0 %v343
        %v516 = vpop.f32.mrf.mxu0
        %v517 = vadd.f32 0.0, %v516
        %v518 = vpop.f32.mrf.mxu0
        %v519 = vadd.f32 0.0, %v518
        %520 = vdwg.mxu0
        %521 = vmatpush.bf16.msra.mxu0 %v473
        %522 = vmatpush.bf16.msra.mxu0 %v471
        %523 = vmatpush.bf16.msra.mxu0 %v469
        %524 = vmatpush.bf16.msra.mxu0 %v467
        %525 = vmatpush.bf16.msra.mxu0 %v465
        %526 = vmatpush.bf16.msra.mxu0 %v463
        %527 = vmatpush.bf16.msra.mxu0 %v461
        %528 = vmatpush.bf16.msra.mxu0 %v459
        %529 = vmatmul.bf16.gmra.mxu0 %v344
        %v530 = vpop.f32.mrf.mxu0
        %v531 = vadd.f32 %v517, %v530
        %v532 = vpop.f32.mrf.mxu0
        %v533 = vadd.f32 %v519, %v532
        %534 = vdwg.mxu0
        %535 = vmatpush.bf16.msra.mxu0 %v458
        %536 = vmatpush.bf16.msra.mxu0 %v456
        %537 = vmatpush.bf16.msra.mxu0 %v454
        %538 = vmatpush.bf16.msra.mxu0 %v452
        %539 = vmatpush.bf16.msra.mxu0 %v450
        %540 = vmatpush.bf16.msra.mxu0 %v448
        %541 = vmatpush.bf16.msra.mxu0 %v446
        %542 = vmatpush.bf16.msra.mxu0 %v444
        %543 = vmatmul.bf16.gmra.mxu0 %v343
        %v544 = vpop.f32.mrf.mxu0
        %v545 = vadd.f32 0.0, %v544
        %v546 = vpop.f32.mrf.mxu0
        %v547 = vadd.f32 0.0, %v546
        %548 = vdwg.mxu0
        %549 = vmatpush.bf16.msra.mxu0 %v474
        %550 = vmatpush.bf16.msra.mxu0 %v472
        %551 = vmatpush.bf16.msra.mxu0 %v470
        %552 = vmatpush.bf16.msra.mxu0 %v468
        %553 = vmatpush.bf16.msra.mxu0 %v466
        %554 = vmatpush.bf16.msra.mxu0 %v464
        %555 = vmatpush.bf16.msra.mxu0 %v462
        %556 = vmatpush.bf16.msra.mxu0 %v460
        %557 = vmatmul.bf16.gmra.mxu0 %v344
        %v558 = vpop.f32.mrf.mxu0
        %v559 = vadd.f32 %v545, %v558
        %v560 = vpop.f32.mrf.mxu0
        %v561 = vadd.f32 %v547, %v560
        %562 = vdwg.mxu0
        %563 = vst [vmem:[#allocation3] sm:$0xff] %v531
        %564 = vst [vmem:[#allocation3 + $0x8] sm:$0xff] %v559
        %565 = vst [vmem:[#allocation3 + $0x10] sm:$0xff] %v533
        %566 = vst [vmem:[#allocation3 + $0x18] sm:$0xff] %v561
        %v567 = vld [vmem:[#allocation3] sm:$0xff]
        %v568 = vld [vmem:[#allocation3 + $0x8] sm:$0xff]
        %v569 = vld [vmem:[#allocation3 + $0x10] sm:$0xff]
        %v570 = vld [vmem:[#allocation3 + $0x18] sm:$0xff]
        %v571 = vld [vmem:[#allocation9] sm:$0x3]
        %v573 = vperm.slane %v571, 0
        %v574 = vperm.slane %v571, 1
        %v577 = vadd.f32 %v567, %v573
        %v578 = vadd.f32 %v568, %v574
        %v579 = vadd.f32 %v569, %v573
        %v580 = vadd.f32 %v570, %v574
        %581 = vst [vmem:[%s221] sm:$0xff] %v577
        %582 = vst [vmem:[%s221 + $0x8] sm:$0xff] %v578
        %583 = vst [vmem:[%s221 + $0x10] sm:$0xff] %v579
        %584 = vst [vmem:[%s221 + $0x18] sm:$0xff] %v580
        %s585 = sand.u32 %s97, 1
        %s586 = scalar_lea.sflag [#allocation6], %s585
        %s587 = sand.u32 %s97, 1
        %s588 = smul.addr %s587, 32
        %s589 = scalar_lea.vmem [#allocation10], %s588
        // Predicated region
        $region45: #{tpu_custom_call.1} parent=31 // pred_check
          %p590 = pneg %p107
        $region46: #{tpu_custom_call.1} parent=31 // pred_check_branch
          %592 = sbr.rel (%p590) target = $region48
        $region47: #{tpu_custom_call.1} parent=31 // pred_region
          %594 = vsyncadd %s586, 0
          %s595 = smul.addr %s21, 4
          %s596 = smul.addr %s595, 8
          %s597 = scalar_lea.hbm %s3, %s596
          %s598 = sshll.u32 %s589, 4
          %s599 = int_to_ptr.vmem [resolvable:$true] %s598
          %s600 = sshll.u32 %s597, 4
          %s601 = int_to_ptr.hbm [resolvable:$true] %s600
          %606 = dma.vmem_to_hbm [thread:$0]  %s599, 512, %s601, %s586, 256, 256, 16
        $region48: #{tpu_custom_call.1} parent=31 // pred_fallthru
          _
      $region32: #{tpu_custom_call.1} parent=5 // pred_fallthru
        _
      %p607 = scmp.le.s32.totalorder 2, %s16
      // Predicated region
      $region49: #{tpu_custom_call.1} parent=5 // pred_check
        %p608 = pneg %p607
      $region50: #{tpu_custom_call.1} parent=5 // pred_check_branch
        %610 = sbr.rel (%p608) target = $region52
      $region51: #{tpu_custom_call.1} parent=5 // pred_region
        %s611 = ssub.s32 %s16, 2
        // Predicated region
        $region53: #{tpu_custom_call.1} parent=51 // pred_check
          %p612 = pneg %p113
        $region54: #{tpu_custom_call.1} parent=51 // pred_check_branch
          %614 = sbr.rel (%p612) target = $region56
        $region55: #{tpu_custom_call.1} parent=51 // pred_region
          %s615 = sand.u32 %s98, 1
          %s616 = scalar_lea.sflag [#allocation6], %s615
          %s617 = sand.u32 %s98, 1
          %s618 = smul.addr %s617, 32
          %s619 = scalar_lea.vmem [#allocation10], %s618
          %621 = dma.done %s616, 512
        $region56: #{tpu_custom_call.1} parent=51 // pred_fallthru
          _
      $region52: #{tpu_custom_call.1} parent=5 // pred_fallthru
        _
    $region6: #{tpu_custom_call.1} parent=1 // loop_footer
      %s20 = sadd.s32 1, %s16
    $region7: #{tpu_custom_call.1} parent=1 // loop_footer_branch
      %15 = sbr.rel target = $region3
    $region8: #{tpu_custom_call.1} parent=1 // loop_exit
      _
    %622 = vsyncpa [#allocation5], 1
    %s623 = scalar_lea.sflag [#allocation5], 1
    %624 = vsyncpa %s623, 1
    %625 = vsyncpa [#allocation8], 1
    %626 = vsyncpa [#allocation6], 1
    %s627 = scalar_lea.sflag [#allocation6], 1
    %628 = vsyncpa %s627, 1

</llo_original>
